<compile_context>
chip_gen: v7x
topology: tpu7x:2x2x1
jax: 0.10.0
libtpu: 0.0.40
codegen_flags: <defaults>
</compile_context>

<pallas_src>
import functools

import jax
import jax.numpy as jnp
from jax import lax
from jax.experimental import pallas as pl
from jax.experimental.pallas import tpu as pltpu

VOCAB = 400001
EMB = 50      # embedding dim == RNN input dim
HID = 50      # RNN hidden dim
OUT = 2       # fc output dim


def _round_up(x, m):
    return ((x + m - 1) // m) * m


def _cdiv(a, b):
    return (a + b - 1) // b


def _choose_tiling(B):
    """Pick (TB, B_pad).

    TB is a multiple of 16 (bf16 emb tile sublane packing).  Small batches use
    a single tile (grid overhead dominates splitting); large batches use an
    even number (>= 2) of tiles, each capped around 512 rows, so v7x's two
    TensorCores both get work and v6e's 256-row MXU passes are filled.
    """
    B16 = _round_up(max(B, 1), 16)
    if B16 <= 256:
        return B16, B16
    n_tiles = max(2, _cdiv(B16, 512))
    if n_tiles % 2:
        n_tiles += 1
    TB = _round_up(_cdiv(B16, n_tiles), 16)
    return TB, TB * n_tiles


def sentiment_kernel(emb_ref, wih_ref, whh_ref, b_ref, wfc_ref, bfc_ref,
                     out_ref, xw_ref, *, unroll):
    """One batch tile of the full RNN + FC + mean + sigmoid.

    emb_ref : (T, TB, EMB) bf16  time-major embedded tokens (batch tile)
    wih_ref : (EMB, HID)   bf16  input->hidden weights, pre-transposed
    whh_ref : (HID, HID)   bf16  hidden->hidden weights, pre-transposed
    b_ref   : (1, HID)     f32   b_ih + b_hh
    wfc_ref : (HID, OUT)   f32   fc weights, pre-transposed
    bfc_ref : (1, OUT)     f32   fc bias
    out_ref : (TB, OUT)    f32   sigmoid(mean_t(fc(h_t)))
    xw_ref  : (T, TB, HID) f32/bf16 VMEM scratch for the pre-projected inputs
    """
    T, TB, _ = emb_ref.shape

    wih = wih_ref[...]
    whh = whh_ref[...]
    wfc = wfc_ref[...]
    bfc = bfc_ref[...]

    # ---- one big GEMM off the serial chain: xw = x @ Wih + (b_ih + b_hh) ----
    x2 = emb_ref[...].reshape(T * TB, EMB)                       # bf16
    xw = jnp.dot(x2, wih, preferred_element_type=jnp.float32)    # bf16 GEMM, f32 acc
    xw = xw + jnp.broadcast_to(b_ref[...], (T * TB, HID))        # bias added once
    xw_ref[...] = xw.reshape(T, TB, HID).astype(xw_ref.dtype)

    # ---- serial recurrence: one bf16 matmul (f32 acc) + tanh per step ----
    def step(t, carry):
        h, h_sum = carry
        hw = jnp.dot(h.astype(jnp.bfloat16), whh,
                     preferred_element_type=jnp.float32)
        h = jnp.tanh(xw_ref[t].astype(jnp.float32) + hw)
        return h, h_sum + h

    h0 = jnp.zeros((TB, HID), jnp.float32)
    _, h_sum = lax.fori_loop(0, T, step, (h0, h0), unroll=unroll)

    # ---- FC hoisted out of the loop: mean_t(h_t @ Wfc + b_fc) ----
    y = jnp.dot(h_sum, wfc, preferred_element_type=jnp.float32) * (1.0 / T) + bfc
    out_ref[...] = jax.nn.sigmoid(y)


def prepare_params(params):
    """One-time weight prep: pre-transpose + pre-cast (done outside the hot path)."""
    emb_table, w_ih, w_hh, b_ih, b_hh, w_fc, b_fc = params
    return (
        emb_table.astype(jnp.bfloat16),                       # bf16 gather source
        w_ih.T.astype(jnp.bfloat16),                          # (EMB, HID)
        w_hh.T.astype(jnp.bfloat16),                          # (HID, HID) bf16 recurrence
        (b_ih + b_hh).reshape(1, HID).astype(jnp.float32),
        w_fc.T.astype(jnp.float32),                           # (HID, OUT)
        b_fc.reshape(1, OUT).astype(jnp.float32),
    )


def sentiment_forward(tokens, prepared):
    """tokens: (B, T) int32.  Returns (B, OUT) float32."""
    emb_bf16, wih_t, whh_t, b_comb, wfc_t, bfc2 = prepared
    B, T = tokens.shape

    TB, B_pad = _choose_tiling(B)
    if B_pad != B:
        tokens = jnp.pad(tokens, ((0, B_pad - B), (0, 0)))

    # Time-major bf16 gather straight from the bf16 table (no f32 intermediate,
    # no separate convert pass over (T, B, EMB)).
    emb = jnp.take(emb_bf16, tokens.T, axis=0)                 # (T, B_pad, EMB) bf16

    # xw scratch dtype: f32 for short sequences (accuracy), bf16 once the f32
    # scratch would get big (long T against v7x's 64 MiB VMEM).
    xw_dtype = jnp.float32 if (T * TB * HID * 4) <= (8 << 20) else jnp.bfloat16

    n_tiles = B_pad // TB
    grid_spec = pltpu.PrefetchScalarGridSpec(
        num_scalar_prefetch=0,
        grid=(n_tiles,),
        in_specs=[
            pl.BlockSpec((T, TB, EMB), lambda i: (0, i, 0)),   # batch-tiled sequence
            pl.BlockSpec((EMB, HID), lambda i: (0, 0)),        # weights: full-array
            pl.BlockSpec((HID, HID), lambda i: (0, 0)),
            pl.BlockSpec((1, HID), lambda i: (0, 0)),
            pl.BlockSpec((HID, OUT), lambda i: (0, 0)),
            pl.BlockSpec((1, OUT), lambda i: (0, 0)),
        ],
        out_specs=pl.BlockSpec((TB, OUT), lambda i: (i, 0)),
        scratch_shapes=[pltpu.VMEM((T, TB, HID), xw_dtype)],
    )

    # Explicit VMEM budget (v5e's scoped default is only 16 MiB):
    # double-buffered emb tile + weights + xw scratch + output, 2x headroom.
    emb_tile_bytes = T * TB * EMB * 2
    weight_bytes = (EMB * HID * 2 + HID * HID * 2 + HID * 4
                    + HID * OUT * 4 + OUT * 4)
    xw_bytes = T * TB * HID * jnp.dtype(xw_dtype).itemsize
    out_bytes = TB * OUT * 4
    need = 2 * emb_tile_bytes + 2 * weight_bytes + xw_bytes + 2 * out_bytes
    vmem_limit = int(min(64 << 20, max(16 << 20, 2 * need)))

    kernel = functools.partial(sentiment_kernel, unroll=min(T, 8))

    out = pl.pallas_call(
        kernel,
        out_shape=jax.ShapeDtypeStruct((B_pad, OUT), jnp.float32),
        grid_spec=grid_spec,
        compiler_params=pltpu.CompilerParams(
            dimension_semantics=("parallel",),
            vmem_limit_bytes=vmem_limit),
    )(emb, wih_t, whh_t, b_comb, wfc_t, bfc2)

    return out[:B]


def reference_forward(tokens, params):
    """Pure-JAX f32 reference matching torch semantics exactly (for verification)."""
    emb_table, w_ih, w_hh, b_ih, b_hh, w_fc, b_fc = params
    emb = jnp.take(emb_table, tokens, axis=0)                  # (B, T, EMB)
    B, T, _ = emb.shape

    def step(h, x_t):
        h = jnp.tanh(x_t @ w_ih.T + b_ih + h @ w_hh.T + b_hh)
        return h, h

    h0 = jnp.zeros((B, HID), jnp.float32)
    _, hs = lax.scan(step, h0, jnp.transpose(emb, (1, 0, 2)))  # (T, B, HID)
    hs = jnp.transpose(hs, (1, 0, 2))                          # (B, T, HID)
    y = hs @ w_fc.T + b_fc                                     # (B, T, OUT)
    y = jnp.mean(y, axis=1)                                    # (B, OUT)
    return jax.nn.sigmoid(y)


def init_params(key):
    k = jax.random.split(key, 7)
    bound = 1.0 / jnp.sqrt(HID)
    emb_table = jax.random.normal(k[0], (VOCAB, EMB), jnp.float32)
    w_ih = jax.random.uniform(k[1], (HID, EMB), jnp.float32, -bound, bound)
    w_hh = jax.random.uniform(k[2], (HID, HID), jnp.float32, -bound, bound)
    b_ih = jax.random.uniform(k[3], (HID,), jnp.float32, -bound, bound)
    b_hh = jax.random.uniform(k[4], (HID,), jnp.float32, -bound, bound)
    w_fc = jax.random.uniform(k[5], (OUT, HID), jnp.float32, -bound, bound)
    b_fc = jax.random.uniform(k[6], (OUT,), jnp.float32, -bound, bound)
    return emb_table, w_ih, w_hh, b_ih, b_hh, w_fc, b_fc


if __name__ == "__main__":
    key = jax.random.PRNGKey(0)
    pkey, xkey = jax.random.split(key)

    params = init_params(pkey)
    prepared = prepare_params(params)

    B, T = 2, 8
    tokens = jax.random.randint(xkey, (B, T), 0, VOCAB, dtype=jnp.int32)

    out = jax.block_until_ready(sentiment_forward(tokens, prepared))
    ref = jax.block_until_ready(reference_forward(tokens, params))

    assert out.shape == (B, OUT), out.shape
    # bf16 on the embedding / Wih / Whh streams (f32 accumulate) => looser
    # tolerance than a pure-f32 pipeline.
    assert jnp.allclose(out, ref, atol=1e-2, rtol=1e-2), (out, ref)

    print("KERNEL_OK")
</pallas_src>

<mosaic_0001>
module attributes {stable_mosaic.version = 11 : i64} {
  func.func @sentiment_kernel(%arg0: i32, %arg1: memref<8x16x50xbf16, #tpu.memory_space<vmem>>, %arg2: memref<50x50xbf16, #tpu.memory_space<vmem>>, %arg3: memref<50x50xbf16, #tpu.memory_space<vmem>>, %arg4: memref<1x50xf32, #tpu.memory_space<vmem>>, %arg5: memref<50x2xf32, #tpu.memory_space<vmem>>, %arg6: memref<1x2xf32, #tpu.memory_space<vmem>>, %arg7: memref<16x2xf32, #tpu.memory_space<vmem>>, %arg8: memref<8x16x50xf32, #tpu.memory_space<vmem>>) attributes {dimension_semantics = [#tpu.dimension_semantics<parallel>], iteration_bounds = array<i64: 1>, scalar_prefetch = 0 : i64, scratch_operands = 1 : i64, tpu.core_type = #tpu.core_type<tc>, window_params = [{transform_indices = @transform_0, window_bounds = array<i64: 8, 16, 50>}, {pipeline_mode = #tpu.pipeline_mode<synchronous>, transform_indices = @transform_1, window_bounds = array<i64: 50, 50>}, {pipeline_mode = #tpu.pipeline_mode<synchronous>, transform_indices = @transform_2, window_bounds = array<i64: 50, 50>}, {pipeline_mode = #tpu.pipeline_mode<synchronous>, transform_indices = @transform_3, window_bounds = array<i64: 1, 50>}, {pipeline_mode = #tpu.pipeline_mode<synchronous>, transform_indices = @transform_4, window_bounds = array<i64: 50, 2>}, {pipeline_mode = #tpu.pipeline_mode<synchronous>, transform_indices = @transform_5, window_bounds = array<i64: 1, 2>}, {transform_indices = @transform_6, window_bounds = array<i64: 16, 2>}]} {
    %c0 = arith.constant 0 : index
    %c0_0 = arith.constant 0 : index
    %0 = vector.load %arg2[%c0, %c0_0] : memref<50x50xbf16, #tpu.memory_space<vmem>>, vector<50x50xbf16>
    %c0_1 = arith.constant 0 : index
    %c0_2 = arith.constant 0 : index
    %1 = vector.load %arg3[%c0_1, %c0_2] : memref<50x50xbf16, #tpu.memory_space<vmem>>, vector<50x50xbf16>
    %c0_3 = arith.constant 0 : index
    %c0_4 = arith.constant 0 : index
    %2 = vector.load %arg5[%c0_3, %c0_4] : memref<50x2xf32, #tpu.memory_space<vmem>>, vector<50x2xf32>
    %c0_5 = arith.constant 0 : index
    %c0_6 = arith.constant 0 : index
    %3 = vector.load %arg6[%c0_5, %c0_6] : memref<1x2xf32, #tpu.memory_space<vmem>>, vector<1x2xf32>
    %c0_7 = arith.constant 0 : index
    %c0_8 = arith.constant 0 : index
    %c0_9 = arith.constant 0 : index
    %4 = vector.load %arg1[%c0_7, %c0_8, %c0_9] : memref<8x16x50xbf16, #tpu.memory_space<vmem>>, vector<8x16x50xbf16>
    %5 = vector.shape_cast %4 : vector<8x16x50xbf16> to vector<128x50xbf16>
    %cst = arith.constant dense<0.000000e+00> : vector<128x50xf32>
    %6 = tpu.matmul %5, %0, %cst {dimension_numbers = #tpu.dot_dimension_numbers<[1], [0], [0], [1], [0, 0, 1, 1], [], []>} : vector<128x50xbf16>, vector<50x50xbf16>, vector<128x50xf32> -> vector<128x50xf32>
    %c0_10 = arith.constant 0 : index
    %c0_11 = arith.constant 0 : index
    %7 = vector.load %arg4[%c0_10, %c0_11] : memref<1x50xf32, #tpu.memory_space<vmem>>, vector<1x50xf32>
    %8 = vector.shape_cast %7 : vector<1x50xf32> to vector<1x50xf32>
    %9 = vector.broadcast %8 : vector<1x50xf32> to vector<128x50xf32>
    %10 = arith.addf %6, %9 : vector<128x50xf32>
    %11 = vector.shape_cast %10 : vector<128x50xf32> to vector<8x16x50xf32>
    %c0_12 = arith.constant 0 : index
    %c0_13 = arith.constant 0 : index
    %c0_14 = arith.constant 0 : index
    %12 = vector.load %arg8[%c0_12, %c0_13, %c0_14] : memref<8x16x50xf32, #tpu.memory_space<vmem>>, vector<8x16x50xf32>
    tpu.vector_store %arg8[%c0_12, %c0_13, %c0_14], %11 {strides = array<i32>} : memref<8x16x50xf32, #tpu.memory_space<vmem>>, vector<8x16x50xf32>,
    %cst_15 = arith.constant 0.000000e+00 : f32
    %13 = vector.broadcast %cst_15 : f32 to vector<16x50xf32>
    %c0_i32 = arith.constant 0 : i32
    %14 = arith.truncf %13 : vector<16x50xf32> to vector<16x50xbf16>
    %cst_16 = arith.constant dense<0.000000e+00> : vector<16x50xf32>
    %15 = tpu.matmul %14, %1, %cst_16 {dimension_numbers = #tpu.dot_dimension_numbers<[1], [0], [0], [1], [0, 0, 1, 1], [], []>} : vector<16x50xbf16>, vector<50x50xbf16>, vector<16x50xf32> -> vector<16x50xf32>
    %16 = arith.index_cast %c0_i32 : i32 to index
    %c0_17 = arith.constant 0 : index
    %c0_18 = arith.constant 0 : index
    %17 = vector.load %arg8[%16, %c0_17, %c0_18] : memref<8x16x50xf32, #tpu.memory_space<vmem>>, vector<1x16x50xf32>
    %18 = vector.shape_cast %17 : vector<1x16x50xf32> to vector<16x50xf32>
    %19 = arith.addf %18, %15 : vector<16x50xf32>
    %20 = math.tanh %19 : vector<16x50xf32>
    %21 = arith.addf %13, %20 : vector<16x50xf32>
    %c1_i32 = arith.constant 1 : i32
    %22 = arith.truncf %20 : vector<16x50xf32> to vector<16x50xbf16>
    %cst_19 = arith.constant dense<0.000000e+00> : vector<16x50xf32>
    %23 = tpu.matmul %22, %1, %cst_19 {dimension_numbers = #tpu.dot_dimension_numbers<[1], [0], [0], [1], [0, 0, 1, 1], [], []>} : vector<16x50xbf16>, vector<50x50xbf16>, vector<16x50xf32> -> vector<16x50xf32>
    %24 = arith.index_cast %c1_i32 : i32 to index
    %c0_20 = arith.constant 0 : index
    %c0_21 = arith.constant 0 : index
    %25 = vector.load %arg8[%24, %c0_20, %c0_21] : memref<8x16x50xf32, #tpu.memory_space<vmem>>, vector<1x16x50xf32>
    %26 = vector.shape_cast %25 : vector<1x16x50xf32> to vector<16x50xf32>
    %27 = arith.addf %26, %23 : vector<16x50xf32>
    %28 = math.tanh %27 : vector<16x50xf32>
    %29 = arith.addf %21, %28 : vector<16x50xf32>
    %c2_i32 = arith.constant 2 : i32
    %30 = arith.truncf %28 : vector<16x50xf32> to vector<16x50xbf16>
    %cst_22 = arith.constant dense<0.000000e+00> : vector<16x50xf32>
    %31 = tpu.matmul %30, %1, %cst_22 {dimension_numbers = #tpu.dot_dimension_numbers<[1], [0], [0], [1], [0, 0, 1, 1], [], []>} : vector<16x50xbf16>, vector<50x50xbf16>, vector<16x50xf32> -> vector<16x50xf32>
    %32 = arith.index_cast %c2_i32 : i32 to index
    %c0_23 = arith.constant 0 : index
    %c0_24 = arith.constant 0 : index
    %33 = vector.load %arg8[%32, %c0_23, %c0_24] : memref<8x16x50xf32, #tpu.memory_space<vmem>>, vector<1x16x50xf32>
    %34 = vector.shape_cast %33 : vector<1x16x50xf32> to vector<16x50xf32>
    %35 = arith.addf %34, %31 : vector<16x50xf32>
    %36 = math.tanh %35 : vector<16x50xf32>
    %37 = arith.addf %29, %36 : vector<16x50xf32>
    %c3_i32 = arith.constant 3 : i32
    %38 = arith.truncf %36 : vector<16x50xf32> to vector<16x50xbf16>
    %cst_25 = arith.constant dense<0.000000e+00> : vector<16x50xf32>
    %39 = tpu.matmul %38, %1, %cst_25 {dimension_numbers = #tpu.dot_dimension_numbers<[1], [0], [0], [1], [0, 0, 1, 1], [], []>} : vector<16x50xbf16>, vector<50x50xbf16>, vector<16x50xf32> -> vector<16x50xf32>
    %40 = arith.index_cast %c3_i32 : i32 to index
    %c0_26 = arith.constant 0 : index
    %c0_27 = arith.constant 0 : index
    %41 = vector.load %arg8[%40, %c0_26, %c0_27] : memref<8x16x50xf32, #tpu.memory_space<vmem>>, vector<1x16x50xf32>
    %42 = vector.shape_cast %41 : vector<1x16x50xf32> to vector<16x50xf32>
    %43 = arith.addf %42, %39 : vector<16x50xf32>
    %44 = math.tanh %43 : vector<16x50xf32>
    %45 = arith.addf %37, %44 : vector<16x50xf32>
    %c4_i32 = arith.constant 4 : i32
    %46 = arith.truncf %44 : vector<16x50xf32> to vector<16x50xbf16>
    %cst_28 = arith.constant dense<0.000000e+00> : vector<16x50xf32>
    %47 = tpu.matmul %46, %1, %cst_28 {dimension_numbers = #tpu.dot_dimension_numbers<[1], [0], [0], [1], [0, 0, 1, 1], [], []>} : vector<16x50xbf16>, vector<50x50xbf16>, vector<16x50xf32> -> vector<16x50xf32>
    %48 = arith.index_cast %c4_i32 : i32 to index
    %c0_29 = arith.constant 0 : index
    %c0_30 = arith.constant 0 : index
    %49 = vector.load %arg8[%48, %c0_29, %c0_30] : memref<8x16x50xf32, #tpu.memory_space<vmem>>, vector<1x16x50xf32>
    %50 = vector.shape_cast %49 : vector<1x16x50xf32> to vector<16x50xf32>
    %51 = arith.addf %50, %47 : vector<16x50xf32>
    %52 = math.tanh %51 : vector<16x50xf32>
    %53 = arith.addf %45, %52 : vector<16x50xf32>
    %c5_i32 = arith.constant 5 : i32
    %54 = arith.truncf %52 : vector<16x50xf32> to vector<16x50xbf16>
    %cst_31 = arith.constant dense<0.000000e+00> : vector<16x50xf32>
    %55 = tpu.matmul %54, %1, %cst_31 {dimension_numbers = #tpu.dot_dimension_numbers<[1], [0], [0], [1], [0, 0, 1, 1], [], []>} : vector<16x50xbf16>, vector<50x50xbf16>, vector<16x50xf32> -> vector<16x50xf32>
    %56 = arith.index_cast %c5_i32 : i32 to index
    %c0_32 = arith.constant 0 : index
    %c0_33 = arith.constant 0 : index
    %57 = vector.load %arg8[%56, %c0_32, %c0_33] : memref<8x16x50xf32, #tpu.memory_space<vmem>>, vector<1x16x50xf32>
    %58 = vector.shape_cast %57 : vector<1x16x50xf32> to vector<16x50xf32>
    %59 = arith.addf %58, %55 : vector<16x50xf32>
    %60 = math.tanh %59 : vector<16x50xf32>
    %61 = arith.addf %53, %60 : vector<16x50xf32>
    %c6_i32 = arith.constant 6 : i32
    %62 = arith.truncf %60 : vector<16x50xf32> to vector<16x50xbf16>
    %cst_34 = arith.constant dense<0.000000e+00> : vector<16x50xf32>
    %63 = tpu.matmul %62, %1, %cst_34 {dimension_numbers = #tpu.dot_dimension_numbers<[1], [0], [0], [1], [0, 0, 1, 1], [], []>} : vector<16x50xbf16>, vector<50x50xbf16>, vector<16x50xf32> -> vector<16x50xf32>
    %64 = arith.index_cast %c6_i32 : i32 to index
    %c0_35 = arith.constant 0 : index
    %c0_36 = arith.constant 0 : index
    %65 = vector.load %arg8[%64, %c0_35, %c0_36] : memref<8x16x50xf32, #tpu.memory_space<vmem>>, vector<1x16x50xf32>
    %66 = vector.shape_cast %65 : vector<1x16x50xf32> to vector<16x50xf32>
    %67 = arith.addf %66, %63 : vector<16x50xf32>
    %68 = math.tanh %67 : vector<16x50xf32>
    %69 = arith.addf %61, %68 : vector<16x50xf32>
    %c7_i32 = arith.constant 7 : i32
    %70 = arith.truncf %68 : vector<16x50xf32> to vector<16x50xbf16>
    %cst_37 = arith.constant dense<0.000000e+00> : vector<16x50xf32>
    %71 = tpu.matmul %70, %1, %cst_37 {dimension_numbers = #tpu.dot_dimension_numbers<[1], [0], [0], [1], [0, 0, 1, 1], [], []>} : vector<16x50xbf16>, vector<50x50xbf16>, vector<16x50xf32> -> vector<16x50xf32>
    %72 = arith.index_cast %c7_i32 : i32 to index
    %c0_38 = arith.constant 0 : index
    %c0_39 = arith.constant 0 : index
    %73 = vector.load %arg8[%72, %c0_38, %c0_39] : memref<8x16x50xf32, #tpu.memory_space<vmem>>, vector<1x16x50xf32>
    %74 = vector.shape_cast %73 : vector<1x16x50xf32> to vector<16x50xf32>
    %75 = arith.addf %74, %71 : vector<16x50xf32>
    %76 = math.tanh %75 : vector<16x50xf32>
    %77 = arith.addf %69, %76 : vector<16x50xf32>
    %c8_i32 = arith.constant 8 : i32
    %cst_40 = arith.constant dense<0.000000e+00> : vector<16x2xf32>
    %78 = tpu.matmul %77, %2, %cst_40 {dimension_numbers = #tpu.dot_dimension_numbers<[1], [0], [0], [1], [0, 0, 1, 1], [], []>} : vector<16x50xf32>, vector<50x2xf32>, vector<16x2xf32> -> vector<16x2xf32>
    %cst_41 = arith.constant 1.250000e-01 : f32
    %79 = vector.broadcast %cst_41 : f32 to vector<16x2xf32>
    %80 = arith.mulf %78, %79 : vector<16x2xf32>
    %81 = vector.broadcast %3 : vector<1x2xf32> to vector<16x2xf32>
    %82 = arith.addf %80, %81 : vector<16x2xf32>
    %83 = arith.negf %82 : vector<16x2xf32>
    %84 = math.exp %83 : vector<16x2xf32>
    %cst_42 = arith.constant 1.000000e+00 : f32
    %85 = vector.broadcast %cst_42 : f32 to vector<16x2xf32>
    %86 = arith.addf %85, %84 : vector<16x2xf32>
    %87 = arith.divf %85, %86 : vector<16x2xf32>
    %c0_43 = arith.constant 0 : index
    %c0_44 = arith.constant 0 : index
    %88 = vector.load %arg7[%c0_43, %c0_44] : memref<16x2xf32, #tpu.memory_space<vmem>>, vector<16x2xf32>
    tpu.vector_store %arg7[%c0_43, %c0_44], %87 {strides = array<i32>} : memref<16x2xf32, #tpu.memory_space<vmem>>, vector<16x2xf32>,
    return
  }
  func.func @transform_0(%arg0: i32) -> (i32, i32, i32) {
    %c0_i32 = arith.constant 0 : i32
    %c0_i32_0 = arith.constant 0 : i32
    %c0_i32_1 = arith.constant 0 : i32
    return %c0_i32, %arg0, %c0_i32_0 : i32, i32, i32
  }
  func.func @transform_1(%arg0: i32) -> (i32, i32) {
    %c0_i32 = arith.constant 0 : i32
    %c0_i32_0 = arith.constant 0 : i32
    %c0_i32_1 = arith.constant 0 : i32
    return %c0_i32, %c0_i32_0 : i32, i32
  }
  func.func @transform_2(%arg0: i32) -> (i32, i32) {
    %c0_i32 = arith.constant 0 : i32
    %c0_i32_0 = arith.constant 0 : i32
    %c0_i32_1 = arith.constant 0 : i32
    return %c0_i32, %c0_i32_0 : i32, i32
  }
  func.func @transform_3(%arg0: i32) -> (i32, i32) {
    %c0_i32 = arith.constant 0 : i32
    %c0_i32_0 = arith.constant 0 : i32
    %c0_i32_1 = arith.constant 0 : i32
    return %c0_i32, %c0_i32_0 : i32, i32
  }
  func.func @transform_4(%arg0: i32) -> (i32, i32) {
    %c0_i32 = arith.constant 0 : i32
    %c0_i32_0 = arith.constant 0 : i32
    %c0_i32_1 = arith.constant 0 : i32
    return %c0_i32, %c0_i32_0 : i32, i32
  }
  func.func @transform_5(%arg0: i32) -> (i32, i32) {
    %c0_i32 = arith.constant 0 : i32
    %c0_i32_0 = arith.constant 0 : i32
    %c0_i32_1 = arith.constant 0 : i32
    return %c0_i32, %c0_i32_0 : i32, i32
  }
  func.func @transform_6(%arg0: i32) -> (i32, i32) {
    %c0_i32 = arith.constant 0 : i32
    %c0_i32_0 = arith.constant 0 : i32
    return %arg0, %c0_i32 : i32, i32
  }
}

</mosaic_0001>

<llo_original>
// kernel: tpu_custom_call.1
$region0: #{tpu_custom_call.1}
  #allocation0 [shape = 'u32[]', space=smem, size = 0x4, offset = 0x4, fixed_abs, tag = 'smem constant byte address 0x4 - core index']
  #allocation1 [shape = 'u32[144,128]{1,0:T(1,128)}', space=vmem, size = 0x12000, scoped, tag = 'internal scratch']
  #allocation2 [shape = 'f32[8,16,50]{2,1,0:T(8,128)}', space=vmem, size = 0x10000, scoped, tag = 'scratch operand']
  %s0 = inlined_call_operand.hbm [shape: bf16[8,16,50], index: 0, kind: input, shape index: {}]
  %s1 = inlined_call_operand.vmem [shape: bf16[50,50], index: 1, kind: input, shape index: {}]
  %s2 = inlined_call_operand.vmem [shape: bf16[50,50], index: 2, kind: input, shape index: {}]
  %s3 = inlined_call_operand.vmem [shape: f32[1,50], index: 3, kind: input, shape index: {}]
  %s4 = inlined_call_operand.vmem [shape: f32[50,2], index: 4, kind: input, shape index: {}]
  %s5 = inlined_call_operand.vmem [shape: f32[1,2], index: 5, kind: input, shape index: {}]
  %s6 = inlined_call_operand.vmem [shape: f32[16,2], index: 6, kind: output, shape index: {}]
  %s7 = sld [smem:[#allocation0]]
  $region38: #{tpu_custom_call.1} parent=0
    _
  %s9 = ssub.s32 1, %s7
  %s10 = scalar_select 0, %s9, %s7
  $region1: #{tpu_custom_call.1} parent=0
    #allocation3 [shape = 'u8[32768]{0}', space=vmem, size = 0x8000, scoped, tag = 'input window, operand 0, single buffered']
    #allocation4 [shape = 's32[1]{0}', space=sflag, size = 0x4, scoped, tag = 'scoped memory for tpu_custom_call.1']
    %11 = vsyncpa [#allocation4], 0
    // Predicated region
    $region2: #{tpu_custom_call.1} parent=1 // pred_check
      _
    $region3: #{tpu_custom_call.1} parent=1 // pred_check_branch
      %13 = sbr.rel (0) target = $region5
    $region4: #{tpu_custom_call.1} parent=1 // pred_region
      %s15 = ssub.s32 1024, 1024
      %16 = vsyncadd [#allocation4], %s15
      %s17 = sshll.u32 [#allocation3], 4
      %s18 = int_to_ptr.vmem [resolvable:$true] %s17
      %23 = dma.hbm_to_vmem [thread:$0]  %s0, 1024, %s18, [#allocation4], 64, 64, 4
    $region5: #{tpu_custom_call.1} parent=1 // pred_fallthru
      _
    // Predicated region
    $region6: #{tpu_custom_call.1} parent=1 // pred_check
      _
    $region7: #{tpu_custom_call.1} parent=1 // pred_check_branch
      %25 = sbr.rel (0) target = $region9
    $region8: #{tpu_custom_call.1} parent=1 // pred_region
      _
    $region9: #{tpu_custom_call.1} parent=1 // pred_fallthru
      _
    // Predicated region
    $region10: #{tpu_custom_call.1} parent=1 // pred_check
      _
    $region11: #{tpu_custom_call.1} parent=1 // pred_check_branch
      %27 = sbr.rel (0) target = $region13
    $region12: #{tpu_custom_call.1} parent=1 // pred_region
      _
    $region13: #{tpu_custom_call.1} parent=1 // pred_fallthru
      _
    // Predicated region
    $region14: #{tpu_custom_call.1} parent=1 // pred_check
      _
    $region15: #{tpu_custom_call.1} parent=1 // pred_check_branch
      %29 = sbr.rel (0) target = $region17
    $region16: #{tpu_custom_call.1} parent=1 // pred_region
      _
    $region17: #{tpu_custom_call.1} parent=1 // pred_fallthru
      _
    // Predicated region
    $region18: #{tpu_custom_call.1} parent=1 // pred_check
      _
    $region19: #{tpu_custom_call.1} parent=1 // pred_check_branch
      %31 = sbr.rel (0) target = $region21
    $region20: #{tpu_custom_call.1} parent=1 // pred_region
      _
    $region21: #{tpu_custom_call.1} parent=1 // pred_fallthru
      _
    // Predicated region
    $region22: #{tpu_custom_call.1} parent=1 // pred_check
      _
    $region23: #{tpu_custom_call.1} parent=1 // pred_check_branch
      %33 = sbr.rel (0) target = $region25
    $region24: #{tpu_custom_call.1} parent=1 // pred_region
      _
    $region25: #{tpu_custom_call.1} parent=1 // pred_fallthru
      _
    // Predicated region
    $region26: #{tpu_custom_call.1} parent=1 // pred_check
      _
    $region27: #{tpu_custom_call.1} parent=1 // pred_check_branch
      %35 = sbr.rel (0) target = $region29
    $region28: #{tpu_custom_call.1} parent=1 // pred_region
      %36 = dma.done [#allocation4], 1024
    $region29: #{tpu_custom_call.1} parent=1 // pred_fallthru
      _
    %v38 = vld [vmem:[%s1] sm:$0xf]
    %v39 = vld [vmem:[%s1 + $0x4] sm:$0xf]
    %v40 = vld [vmem:[%s1 + $0x8] sm:$0xf]
    %v41 = vld [vmem:[%s1 + $0xc] sm:$0xf]
    %v42 = vld [vmem:[%s1 + $0x10] sm:$0xf]
    %v43 = vld [vmem:[%s1 + $0x14] sm:$0xf]
    %v44 = vld [vmem:[%s1 + $0x18] sm:$0x1]
    %v45 = vld [vmem:[%s2] sm:$0xf]
    %v46 = vld [vmem:[%s2 + $0x4] sm:$0xf]
    %v47 = vld [vmem:[%s2 + $0x8] sm:$0xf]
    %v48 = vld [vmem:[%s2 + $0xc] sm:$0xf]
    %v49 = vld [vmem:[%s2 + $0x10] sm:$0xf]
    %v50 = vld [vmem:[%s2 + $0x14] sm:$0xf]
    %v51 = vld [vmem:[%s2 + $0x18] sm:$0x1]
    %v52 = vld [vmem:[%s4] sm:$0xff]
    %v53 = vld [vmem:[%s4 + $0x8] sm:$0xff]
    %v54 = vld [vmem:[%s4 + $0x10] sm:$0xff]
    %v55 = vld [vmem:[%s4 + $0x18] sm:$0xff]
    %v56 = vld [vmem:[%s4 + $0x20] sm:$0xff]
    %v57 = vld [vmem:[%s4 + $0x28] sm:$0xff]
    %v58 = vld [vmem:[%s4 + $0x30] sm:$0x3]
    %v59 = vld [vmem:[%s5] sm:$0x1]
    %v60 = vld [vmem:[#allocation3] sm:$0xf]
    %v61 = vld [vmem:[#allocation3 + $0x4] sm:$0xf]
    %v62 = vld [vmem:[#allocation3 + $0x8] sm:$0xf]
    %v63 = vld [vmem:[#allocation3 + $0xc] sm:$0xf]
    %v64 = vld [vmem:[#allocation3 + $0x10] sm:$0xf]
    %v65 = vld [vmem:[#allocation3 + $0x14] sm:$0xf]
    %v66 = vld [vmem:[#allocation3 + $0x18] sm:$0xf]
    %v67 = vld [vmem:[#allocation3 + $0x1c] sm:$0xf]
    %v68 = vld [vmem:[#allocation3 + $0x20] sm:$0xf]
    %v69 = vld [vmem:[#allocation3 + $0x24] sm:$0xf]
    %v70 = vld [vmem:[#allocation3 + $0x28] sm:$0xf]
    %v71 = vld [vmem:[#allocation3 + $0x2c] sm:$0xf]
    %v72 = vld [vmem:[#allocation3 + $0x30] sm:$0xf]
    %v73 = vld [vmem:[#allocation3 + $0x34] sm:$0xf]
    %v74 = vld [vmem:[#allocation3 + $0x38] sm:$0xf]
    %v75 = vld [vmem:[#allocation3 + $0x3c] sm:$0xf]
    %v76 = vld [vmem:[%s3] sm:$0x1]
    %v78 = vlaneseq
    %v79 = vshrl.u32 %v78, 7
    %v80 = vsub.s32 0, %v79
    %v81 = vrot.slane %v76, %v80
    %v99 = vunpack.c.l.b16 %v60
    %v100 = vunpack.c.l.b16 %v61
    %v101 = vunpack.c.l.b16 %v62
    %v102 = vunpack.c.l.b16 %v63
    %v103 = vunpack.c.l.b16 %v64
    %v104 = vunpack.c.l.b16 %v65
    %v105 = vunpack.c.l.b16 %v66
    %v106 = vunpack.c.l.b16 %v67
    %v107 = vunpack.c.l.b16 %v68
    %v108 = vunpack.c.l.b16 %v69
    %v109 = vunpack.c.l.b16 %v70
    %v110 = vunpack.c.l.b16 %v71
    %v111 = vunpack.c.l.b16 %v72
    %v112 = vunpack.c.l.b16 %v73
    %v113 = vunpack.c.l.b16 %v74
    %v114 = vunpack.c.l.b16 %v75
    %v115 = vpack.c.b16 %v100, %v99
    %v116 = vpack.c.b16 %v102, %v101
    %v117 = vpack.c.b16 %v104, %v103
    %v118 = vpack.c.b16 %v106, %v105
    %v119 = vpack.c.b16 %v108, %v107
    %v120 = vpack.c.b16 %v110, %v109
    %v121 = vpack.c.b16 %v112, %v111
    %v122 = vpack.c.b16 %v114, %v113
    %v130 = vunpack.c.l.b16 %v38
    %v131 = vunpack.c.l.b16 %v39
    %v132 = vunpack.c.l.b16 %v40
    %v133 = vunpack.c.l.b16 %v41
    %v134 = vunpack.c.l.b16 %v42
    %v135 = vunpack.c.l.b16 %v43
    %v136 = vunpack.c.l.b16 %v44
    %v137 = vpack.c.b16 %v131, %v130
    %v138 = vpack.c.b16 %v133, %v132
    %v139 = vpack.c.b16 %v135, %v134
    %v140 = vpack.c.b16 %v136, %v136
    %vm144 = vcmask 408576
    %v146 = vsel %vm144, %v115, 0
    %v149 = vsel %vm144, %v116, 0
    %v152 = vsel %vm144, %v117, 0
    %v155 = vsel %vm144, %v118, 0
    %v158 = vsel %vm144, %v119, 0
    %v161 = vsel %vm144, %v120, 0
    %v164 = vsel %vm144, %v121, 0
    %v167 = vsel %vm144, %v122, 0
    %vm169 = vcmask 1040384
    %v171 = vsel %vm169, %v140, 0
    %173 = vmatprep.subr.bf16.mxu0 0
    %174 = vmatpush1.bf16.msra.mxu0 %v137
    %175 = vmatprep.subr.bf16.mxu0 0
    %176 = vmatpush1.bf16.msra.mxu0 %v138
    %177 = vmatprep.subr.bf16.mxu0 0
    %178 = vmatpush1.bf16.msra.mxu0 %v139
    %179 = vmatprep.subr.bf16.mxu0 0
    %180 = vmatpush1.bf16.msra.mxu0 %v171
    %181 = vmatprep.subr.bf16.mxu0 0
    %182 = vmatpush1.bf16.msra.mxu0 0
    %183 = vmatprep.subr.bf16.mxu0 0
    %184 = vmatpush1.bf16.msra.mxu0 0
    %185 = vmatprep.subr.bf16.mxu0 0
    %186 = vmatpush1.bf16.msra.mxu0 0
    %187 = vmatprep.subr.bf16.mxu0 0
    %188 = vmatpush1.bf16.msra.mxu0 0
    %189 = vmatprep.subr.bf16.mxu0 0
    %190 = vmatpush1.bf16.msra.mxu0 0
    %191 = vmatprep.subr.bf16.mxu0 0
    %192 = vmatpush1.bf16.msra.mxu0 0
    %193 = vmatprep.subr.bf16.mxu0 0
    %194 = vmatpush1.bf16.msra.mxu0 0
    %195 = vmatprep.subr.bf16.mxu0 0
    %196 = vmatpush1.bf16.msra.mxu0 0
    %197 = vmatprep.subr.bf16.mxu0 0
    %198 = vmatpush1.bf16.msra.mxu0 0
    %199 = vmatprep.subr.bf16.mxu0 0
    %200 = vmatpush1.bf16.msra.mxu0 0
    %201 = vmatprep.subr.bf16.mxu0 0
    %202 = vmatpush1.bf16.msra.mxu0 0
    %203 = vmatprep.subr.bf16.mxu0 0
    %204 = vmatpush1.bf16.msra.mxu0 0
    %205 = vmatprep.mubr.bf16.mxu0 0
    %206 = vmatmul.mubr.bf16.gmra.mrb[0].mxu0 %v146
    %v207 = vpop.f32.mrb[0].mxu0
    %v208 = vadd.f32 %v81, %v207
    %v209 = vpop.f32.mrb[0].mxu0
    %v210 = vpop.f32.mrb[0].mxu0
    %v211 = vadd.f32 %v81, %v210
    %v212 = vpop.f32.mrb[0].mxu0
    %213 = vmatprep.mubr.bf16.mxu0 0
    %214 = vmatmul.mubr.bf16.gmra.mrb[0].mxu0 %v149
    %v215 = vpop.f32.mrb[0].mxu0
    %v216 = vadd.f32 %v81, %v215
    %v217 = vpop.f32.mrb[0].mxu0
    %v218 = vpop.f32.mrb[0].mxu0
    %v219 = vadd.f32 %v81, %v218
    %v220 = vpop.f32.mrb[0].mxu0
    %221 = vmatprep.mubr.bf16.mxu0 0
    %222 = vmatmul.mubr.bf16.gmra.mrb[0].mxu0 %v152
    %v223 = vpop.f32.mrb[0].mxu0
    %v224 = vadd.f32 %v81, %v223
    %v225 = vpop.f32.mrb[0].mxu0
    %v226 = vpop.f32.mrb[0].mxu0
    %v227 = vadd.f32 %v81, %v226
    %v228 = vpop.f32.mrb[0].mxu0
    %229 = vmatprep.mubr.bf16.mxu0 0
    %230 = vmatmul.mubr.bf16.gmra.mrb[0].mxu0 %v155
    %v231 = vpop.f32.mrb[0].mxu0
    %v232 = vadd.f32 %v81, %v231
    %v233 = vpop.f32.mrb[0].mxu0
    %v234 = vpop.f32.mrb[0].mxu0
    %v235 = vadd.f32 %v81, %v234
    %v236 = vpop.f32.mrb[0].mxu0
    %237 = vmatprep.mubr.bf16.mxu0 0
    %238 = vmatmul.mubr.bf16.gmra.mrb[0].mxu0 %v158
    %v239 = vpop.f32.mrb[0].mxu0
    %v240 = vadd.f32 %v81, %v239
    %v241 = vpop.f32.mrb[0].mxu0
    %v242 = vpop.f32.mrb[0].mxu0
    %v243 = vadd.f32 %v81, %v242
    %v244 = vpop.f32.mrb[0].mxu0
    %245 = vmatprep.mubr.bf16.mxu0 0
    %246 = vmatmul.mubr.bf16.gmra.mrb[0].mxu0 %v161
    %v247 = vpop.f32.mrb[0].mxu0
    %v248 = vadd.f32 %v81, %v247
    %v249 = vpop.f32.mrb[0].mxu0
    %v250 = vpop.f32.mrb[0].mxu0
    %v251 = vadd.f32 %v81, %v250
    %v252 = vpop.f32.mrb[0].mxu0
    %253 = vmatprep.mubr.bf16.mxu0 0
    %254 = vmatmul.mubr.bf16.gmra.mrb[0].mxu0 %v164
    %v255 = vpop.f32.mrb[0].mxu0
    %v256 = vadd.f32 %v81, %v255
    %v257 = vpop.f32.mrb[0].mxu0
    %v258 = vpop.f32.mrb[0].mxu0
    %v259 = vadd.f32 %v81, %v258
    %v260 = vpop.f32.mrb[0].mxu0
    %261 = vmatprep.mubr.bf16.mxu0 0
    %262 = vmatmul.mubr.bf16.gmra.mrb[0].mxu0 %v167
    %v263 = vpop.f32.mrb[0].mxu0
    %v264 = vadd.f32 %v81, %v263
    %v265 = vpop.f32.mrb[0].mxu0
    %v266 = vpop.f32.mrb[0].mxu0
    %v267 = vadd.f32 %v81, %v266
    %v268 = vpop.f32.mrb[0].mxu0
    %269 = vdwg.mxu0
    %270 = vst.msk [vmem:[#allocation2] sm:$0xff] %vm144, %v208
    %271 = vst.msk [vmem:[#allocation2 + $0x8] sm:$0xff] %vm144, %v211
    %272 = vst.msk [vmem:[#allocation2 + $0x10] sm:$0xff] %vm144, %v216
    %273 = vst.msk [vmem:[#allocation2 + $0x18] sm:$0xff] %vm144, %v219
    %274 = vst.msk [vmem:[#allocation2 + $0x20] sm:$0xff] %vm144, %v224
    %275 = vst.msk [vmem:[#allocation2 + $0x28] sm:$0xff] %vm144, %v227
    %276 = vst.msk [vmem:[#allocation2 + $0x30] sm:$0xff] %vm144, %v232
    %277 = vst.msk [vmem:[#allocation2 + $0x38] sm:$0xff] %vm144, %v235
    %278 = vst.msk [vmem:[#allocation2 + $0x40] sm:$0xff] %vm144, %v240
    %279 = vst.msk [vmem:[#allocation2 + $0x48] sm:$0xff] %vm144, %v243
    %280 = vst.msk [vmem:[#allocation2 + $0x50] sm:$0xff] %vm144, %v248
    %281 = vst.msk [vmem:[#allocation2 + $0x58] sm:$0xff] %vm144, %v251
    %282 = vst.msk [vmem:[#allocation2 + $0x60] sm:$0xff] %vm144, %v256
    %283 = vst.msk [vmem:[#allocation2 + $0x68] sm:$0xff] %vm144, %v259
    %284 = vst.msk [vmem:[#allocation2 + $0x70] sm:$0xff] %vm144, %v264
    %285 = vst.msk [vmem:[#allocation2 + $0x78] sm:$0xff] %vm144, %v267
    %v293 = vunpack.c.l.b16 %v45
    %v294 = vunpack.c.l.b16 %v46
    %v295 = vunpack.c.l.b16 %v47
    %v296 = vunpack.c.l.b16 %v48
    %v297 = vunpack.c.l.b16 %v49
    %v298 = vunpack.c.l.b16 %v50
    %v299 = vunpack.c.l.b16 %v51
    %v300 = vpack.c.b16 %v294, %v293
    %v301 = vpack.c.b16 %v296, %v295
    %v302 = vpack.c.b16 %v298, %v297
    %v303 = vpack.c.b16 %v299, %v299
    %v308 = vsel %vm144, 0, 0
    %v311 = vsel %vm169, %v303, 0
    %313 = vmatprep.subr.bf16.mxu0 0
    %314 = vmatpush1.bf16.msra.mxu0 %v300
    %315 = vmatprep.subr.bf16.mxu0 0
    %316 = vmatpush1.bf16.msra.mxu0 %v301
    %317 = vmatprep.subr.bf16.mxu0 0
    %318 = vmatpush1.bf16.msra.mxu0 %v302
    %319 = vmatprep.subr.bf16.mxu0 0
    %320 = vmatpush1.bf16.msra.mxu0 %v311
    %321 = vmatprep.subr.bf16.mxu0 0
    %322 = vmatpush1.bf16.msra.mxu0 0
    %323 = vmatprep.subr.bf16.mxu0 0
    %324 = vmatpush1.bf16.msra.mxu0 0
    %325 = vmatprep.subr.bf16.mxu0 0
    %326 = vmatpush1.bf16.msra.mxu0 0
    %327 = vmatprep.subr.bf16.mxu0 0
    %328 = vmatpush1.bf16.msra.mxu0 0
    %329 = vmatprep.subr.bf16.mxu0 0
    %330 = vmatpush1.bf16.msra.mxu0 0
    %331 = vmatprep.subr.bf16.mxu0 0
    %332 = vmatpush1.bf16.msra.mxu0 0
    %333 = vmatprep.subr.bf16.mxu0 0
    %334 = vmatpush1.bf16.msra.mxu0 0
    %335 = vmatprep.subr.bf16.mxu0 0
    %336 = vmatpush1.bf16.msra.mxu0 0
    %337 = vmatprep.subr.bf16.mxu0 0
    %338 = vmatpush1.bf16.msra.mxu0 0
    %339 = vmatprep.subr.bf16.mxu0 0
    %340 = vmatpush1.bf16.msra.mxu0 0
    %341 = vmatprep.subr.bf16.mxu0 0
    %342 = vmatpush1.bf16.msra.mxu0 0
    %343 = vmatprep.subr.bf16.mxu0 0
    %344 = vmatpush1.bf16.msra.mxu0 0
    %345 = vmatprep.mubr.bf16.mxu0 0
    %346 = vmatmul.mubr.bf16.gmra.mrb[0].mxu0 %v308
    %v347 = vpop.f32.mrb[0].mxu0
    %v348 = vadd.f32 0.0, %v347
    %v349 = vpop.f32.mrb[0].mxu0
    %v350 = vpop.f32.mrb[0].mxu0
    %v351 = vadd.f32 0.0, %v350
    %v352 = vpop.f32.mrb[0].mxu0
    %353 = vdwg.mxu0
    %v354 = vld [vmem:[#allocation2] sm:$0xff]
    %v355 = vld [vmem:[#allocation2 + $0x8] sm:$0xff]
    %v356 = vadd.f32 %v354, %v348
    %v357 = vadd.f32 %v355, %v351
    %v358 = vtanh.pop %v356
    %v359 = vtanh.pop %v357
    %v360 = vadd.f32 %v358, 0.0
    %v361 = vadd.f32 %v359, 0.0
    %v362 = vpack.c.bf16 %v359, %v358
    %v364 = vsel %vm144, %v362, 0
    %366 = vmatprep.subr.bf16.mxu0 0
    %367 = vmatpush1.bf16.msra.mxu0 %v300
    %368 = vmatprep.subr.bf16.mxu0 0
    %369 = vmatpush1.bf16.msra.mxu0 %v301
    %370 = vmatprep.subr.bf16.mxu0 0
    %371 = vmatpush1.bf16.msra.mxu0 %v302
    %372 = vmatprep.subr.bf16.mxu0 0
    %373 = vmatpush1.bf16.msra.mxu0 %v311
    %374 = vmatprep.subr.bf16.mxu0 0
    %375 = vmatpush1.bf16.msra.mxu0 0
    %376 = vmatprep.subr.bf16.mxu0 0
    %377 = vmatpush1.bf16.msra.mxu0 0
    %378 = vmatprep.subr.bf16.mxu0 0
    %379 = vmatpush1.bf16.msra.mxu0 0
    %380 = vmatprep.subr.bf16.mxu0 0
    %381 = vmatpush1.bf16.msra.mxu0 0
    %382 = vmatprep.subr.bf16.mxu0 0
    %383 = vmatpush1.bf16.msra.mxu0 0
    %384 = vmatprep.subr.bf16.mxu0 0
    %385 = vmatpush1.bf16.msra.mxu0 0
    %386 = vmatprep.subr.bf16.mxu0 0
    %387 = vmatpush1.bf16.msra.mxu0 0
    %388 = vmatprep.subr.bf16.mxu0 0
    %389 = vmatpush1.bf16.msra.mxu0 0
    %390 = vmatprep.subr.bf16.mxu0 0
    %391 = vmatpush1.bf16.msra.mxu0 0
    %392 = vmatprep.subr.bf16.mxu0 0
    %393 = vmatpush1.bf16.msra.mxu0 0
    %394 = vmatprep.subr.bf16.mxu0 0
    %395 = vmatpush1.bf16.msra.mxu0 0
    %396 = vmatprep.subr.bf16.mxu0 0
    %397 = vmatpush1.bf16.msra.mxu0 0
    %398 = vmatprep.mubr.bf16.mxu0 0
    %399 = vmatmul.mubr.bf16.gmra.mrb[0].mxu0 %v364
    %v400 = vpop.f32.mrb[0].mxu0
    %v401 = vadd.f32 0.0, %v400
    %v402 = vpop.f32.mrb[0].mxu0
    %v403 = vpop.f32.mrb[0].mxu0
    %v404 = vadd.f32 0.0, %v403
    %v405 = vpop.f32.mrb[0].mxu0
    %406 = vdwg.mxu0
    %s407 = scalar_lea.vmem [#allocation2], 16
    %v408 = vld [vmem:[%s407] sm:$0xff]
    %v409 = vld [vmem:[%s407 + $0x8] sm:$0xff]
    %v410 = vadd.f32 %v408, %v401
    %v411 = vadd.f32 %v409, %v404
    %v412 = vtanh.pop %v410
    %v413 = vtanh.pop %v411
    %v414 = vadd.f32 %v360, %v412
    %v415 = vadd.f32 %v361, %v413
    %v416 = vpack.c.bf16 %v413, %v412
    %v418 = vsel %vm144, %v416, 0
    %420 = vmatprep.subr.bf16.mxu0 0
    %421 = vmatpush1.bf16.msra.mxu0 %v300
    %422 = vmatprep.subr.bf16.mxu0 0
    %423 = vmatpush1.bf16.msra.mxu0 %v301
    %424 = vmatprep.subr.bf16.mxu0 0
    %425 = vmatpush1.bf16.msra.mxu0 %v302
    %426 = vmatprep.subr.bf16.mxu0 0
    %427 = vmatpush1.bf16.msra.mxu0 %v311
    %428 = vmatprep.subr.bf16.mxu0 0
    %429 = vmatpush1.bf16.msra.mxu0 0
    %430 = vmatprep.subr.bf16.mxu0 0
    %431 = vmatpush1.bf16.msra.mxu0 0
    %432 = vmatprep.subr.bf16.mxu0 0
    %433 = vmatpush1.bf16.msra.mxu0 0
    %434 = vmatprep.subr.bf16.mxu0 0
    %435 = vmatpush1.bf16.msra.mxu0 0
    %436 = vmatprep.subr.bf16.mxu0 0
    %437 = vmatpush1.bf16.msra.mxu0 0
    %438 = vmatprep.subr.bf16.mxu0 0
    %439 = vmatpush1.bf16.msra.mxu0 0
    %440 = vmatprep.subr.bf16.mxu0 0
    %441 = vmatpush1.bf16.msra.mxu0 0
    %442 = vmatprep.subr.bf16.mxu0 0
    %443 = vmatpush1.bf16.msra.mxu0 0
    %444 = vmatprep.subr.bf16.mxu0 0
    %445 = vmatpush1.bf16.msra.mxu0 0
    %446 = vmatprep.subr.bf16.mxu0 0
    %447 = vmatpush1.bf16.msra.mxu0 0
    %448 = vmatprep.subr.bf16.mxu0 0
    %449 = vmatpush1.bf16.msra.mxu0 0
    %450 = vmatprep.subr.bf16.mxu0 0
    %451 = vmatpush1.bf16.msra.mxu0 0
    %452 = vmatprep.mubr.bf16.mxu0 0
    %453 = vmatmul.mubr.bf16.gmra.mrb[0].mxu0 %v418
    %v454 = vpop.f32.mrb[0].mxu0
    %v455 = vadd.f32 0.0, %v454
    %v456 = vpop.f32.mrb[0].mxu0
    %v457 = vpop.f32.mrb[0].mxu0
    %v458 = vadd.f32 0.0, %v457
    %v459 = vpop.f32.mrb[0].mxu0
    %460 = vdwg.mxu0
    %s461 = scalar_lea.vmem [#allocation2], 32
    %v462 = vld [vmem:[%s461] sm:$0xff]
    %v463 = vld [vmem:[%s461 + $0x8] sm:$0xff]
    %v464 = vadd.f32 %v462, %v455
    %v465 = vadd.f32 %v463, %v458
    %v466 = vtanh.pop %v464
    %v467 = vtanh.pop %v465
    %v468 = vadd.f32 %v414, %v466
    %v469 = vadd.f32 %v415, %v467
    %v470 = vpack.c.bf16 %v467, %v466
    %v472 = vsel %vm144, %v470, 0
    %474 = vmatprep.subr.bf16.mxu0 0
    %475 = vmatpush1.bf16.msra.mxu0 %v300
    %476 = vmatprep.subr.bf16.mxu0 0
    %477 = vmatpush1.bf16.msra.mxu0 %v301
    %478 = vmatprep.subr.bf16.mxu0 0
    %479 = vmatpush1.bf16.msra.mxu0 %v302
    %480 = vmatprep.subr.bf16.mxu0 0
    %481 = vmatpush1.bf16.msra.mxu0 %v311
    %482 = vmatprep.subr.bf16.mxu0 0
    %483 = vmatpush1.bf16.msra.mxu0 0
    %484 = vmatprep.subr.bf16.mxu0 0
    %485 = vmatpush1.bf16.msra.mxu0 0
    %486 = vmatprep.subr.bf16.mxu0 0
    %487 = vmatpush1.bf16.msra.mxu0 0
    %488 = vmatprep.subr.bf16.mxu0 0
    %489 = vmatpush1.bf16.msra.mxu0 0
    %490 = vmatprep.subr.bf16.mxu0 0
    %491 = vmatpush1.bf16.msra.mxu0 0
    %492 = vmatprep.subr.bf16.mxu0 0
    %493 = vmatpush1.bf16.msra.mxu0 0
    %494 = vmatprep.subr.bf16.mxu0 0
    %495 = vmatpush1.bf16.msra.mxu0 0
    %496 = vmatprep.subr.bf16.mxu0 0
    %497 = vmatpush1.bf16.msra.mxu0 0
    %498 = vmatprep.subr.bf16.mxu0 0
    %499 = vmatpush1.bf16.msra.mxu0 0
    %500 = vmatprep.subr.bf16.mxu0 0
    %501 = vmatpush1.bf16.msra.mxu0 0
    %502 = vmatprep.subr.bf16.mxu0 0
    %503 = vmatpush1.bf16.msra.mxu0 0
    %504 = vmatprep.subr.bf16.mxu0 0
    %505 = vmatpush1.bf16.msra.mxu0 0
    %506 = vmatprep.mubr.bf16.mxu0 0
    %507 = vmatmul.mubr.bf16.gmra.mrb[0].mxu0 %v472
    %v508 = vpop.f32.mrb[0].mxu0
    %v509 = vadd.f32 0.0, %v508
    %v510 = vpop.f32.mrb[0].mxu0
    %v511 = vpop.f32.mrb[0].mxu0
    %v512 = vadd.f32 0.0, %v511
    %v513 = vpop.f32.mrb[0].mxu0
    %514 = vdwg.mxu0
    %s515 = scalar_lea.vmem [#allocation2], 48
    %v516 = vld [vmem:[%s515] sm:$0xff]
    %v517 = vld [vmem:[%s515 + $0x8] sm:$0xff]
    %v518 = vadd.f32 %v516, %v509
    %v519 = vadd.f32 %v517, %v512
    %v520 = vtanh.pop %v518
    %v521 = vtanh.pop %v519
    %v522 = vadd.f32 %v468, %v520
    %v523 = vadd.f32 %v469, %v521
    %v524 = vpack.c.bf16 %v521, %v520
    %v526 = vsel %vm144, %v524, 0
    %528 = vmatprep.subr.bf16.mxu0 0
    %529 = vmatpush1.bf16.msra.mxu0 %v300
    %530 = vmatprep.subr.bf16.mxu0 0
    %531 = vmatpush1.bf16.msra.mxu0 %v301
    %532 = vmatprep.subr.bf16.mxu0 0
    %533 = vmatpush1.bf16.msra.mxu0 %v302
    %534 = vmatprep.subr.bf16.mxu0 0
    %535 = vmatpush1.bf16.msra.mxu0 %v311
    %536 = vmatprep.subr.bf16.mxu0 0
    %537 = vmatpush1.bf16.msra.mxu0 0
    %538 = vmatprep.subr.bf16.mxu0 0
    %539 = vmatpush1.bf16.msra.mxu0 0
    %540 = vmatprep.subr.bf16.mxu0 0
    %541 = vmatpush1.bf16.msra.mxu0 0
    %542 = vmatprep.subr.bf16.mxu0 0
    %543 = vmatpush1.bf16.msra.mxu0 0
    %544 = vmatprep.subr.bf16.mxu0 0
    %545 = vmatpush1.bf16.msra.mxu0 0
    %546 = vmatprep.subr.bf16.mxu0 0
    %547 = vmatpush1.bf16.msra.mxu0 0
    %548 = vmatprep.subr.bf16.mxu0 0
    %549 = vmatpush1.bf16.msra.mxu0 0
    %550 = vmatprep.subr.bf16.mxu0 0
    %551 = vmatpush1.bf16.msra.mxu0 0
    %552 = vmatprep.subr.bf16.mxu0 0
    %553 = vmatpush1.bf16.msra.mxu0 0
    %554 = vmatprep.subr.bf16.mxu0 0
    %555 = vmatpush1.bf16.msra.mxu0 0
    %556 = vmatprep.subr.bf16.mxu0 0
    %557 = vmatpush1.bf16.msra.mxu0 0
    %558 = vmatprep.subr.bf16.mxu0 0
    %559 = vmatpush1.bf16.msra.mxu0 0
    %560 = vmatprep.mubr.bf16.mxu0 0
    %561 = vmatmul.mubr.bf16.gmra.mrb[0].mxu0 %v526
    %v562 = vpop.f32.mrb[0].mxu0
    %v563 = vadd.f32 0.0, %v562
    %v564 = vpop.f32.mrb[0].mxu0
    %v565 = vpop.f32.mrb[0].mxu0
    %v566 = vadd.f32 0.0, %v565
    %v567 = vpop.f32.mrb[0].mxu0
    %568 = vdwg.mxu0
    %s569 = scalar_lea.vmem [#allocation2], 64
    %v570 = vld [vmem:[%s569] sm:$0xff]
    %v571 = vld [vmem:[%s569 + $0x8] sm:$0xff]
    %v572 = vadd.f32 %v570, %v563
    %v573 = vadd.f32 %v571, %v566
    %v574 = vtanh.pop %v572
    %v575 = vtanh.pop %v573
    %v576 = vadd.f32 %v522, %v574
    %v577 = vadd.f32 %v523, %v575
    %v578 = vpack.c.bf16 %v575, %v574
    %v580 = vsel %vm144, %v578, 0
    %582 = vmatprep.subr.bf16.mxu0 0
    %583 = vmatpush1.bf16.msra.mxu0 %v300
    %584 = vmatprep.subr.bf16.mxu0 0
    %585 = vmatpush1.bf16.msra.mxu0 %v301
    %586 = vmatprep.subr.bf16.mxu0 0
    %587 = vmatpush1.bf16.msra.mxu0 %v302
    %588 = vmatprep.subr.bf16.mxu0 0
    %589 = vmatpush1.bf16.msra.mxu0 %v311
    %590 = vmatprep.subr.bf16.mxu0 0
    %591 = vmatpush1.bf16.msra.mxu0 0
    %592 = vmatprep.subr.bf16.mxu0 0
    %593 = vmatpush1.bf16.msra.mxu0 0
    %594 = vmatprep.subr.bf16.mxu0 0
    %595 = vmatpush1.bf16.msra.mxu0 0
    %596 = vmatprep.subr.bf16.mxu0 0
    %597 = vmatpush1.bf16.msra.mxu0 0
    %598 = vmatprep.subr.bf16.mxu0 0
    %599 = vmatpush1.bf16.msra.mxu0 0
    %600 = vmatprep.subr.bf16.mxu0 0
    %601 = vmatpush1.bf16.msra.mxu0 0
    %602 = vmatprep.subr.bf16.mxu0 0
    %603 = vmatpush1.bf16.msra.mxu0 0
    %604 = vmatprep.subr.bf16.mxu0 0
    %605 = vmatpush1.bf16.msra.mxu0 0
    %606 = vmatprep.subr.bf16.mxu0 0
    %607 = vmatpush1.bf16.msra.mxu0 0
    %608 = vmatprep.subr.bf16.mxu0 0
    %609 = vmatpush1.bf16.msra.mxu0 0
    %610 = vmatprep.subr.bf16.mxu0 0
    %611 = vmatpush1.bf16.msra.mxu0 0
    %612 = vmatprep.subr.bf16.mxu0 0
    %613 = vmatpush1.bf16.msra.mxu0 0
    %614 = vmatprep.mubr.bf16.mxu0 0
    %615 = vmatmul.mubr.bf16.gmra.mrb[0].mxu0 %v580
    %v616 = vpop.f32.mrb[0].mxu0
    %v617 = vadd.f32 0.0, %v616
    %v618 = vpop.f32.mrb[0].mxu0
    %v619 = vpop.f32.mrb[0].mxu0
    %v620 = vadd.f32 0.0, %v619
    %v621 = vpop.f32.mrb[0].mxu0
    %622 = vdwg.mxu0
    %s623 = scalar_lea.vmem [#allocation2], 80
    %v624 = vld [vmem:[%s623] sm:$0xff]
    %v625 = vld [vmem:[%s623 + $0x8] sm:$0xff]
    %v626 = vadd.f32 %v624, %v617
    %v627 = vadd.f32 %v625, %v620
    %v628 = vtanh.pop %v626
    %v629 = vtanh.pop %v627
    %v630 = vadd.f32 %v576, %v628
    %v631 = vadd.f32 %v577, %v629
    %v632 = vpack.c.bf16 %v629, %v628
    %v634 = vsel %vm144, %v632, 0
    %636 = vmatprep.subr.bf16.mxu0 0
    %637 = vmatpush1.bf16.msra.mxu0 %v300
    %638 = vmatprep.subr.bf16.mxu0 0
    %639 = vmatpush1.bf16.msra.mxu0 %v301
    %640 = vmatprep.subr.bf16.mxu0 0
    %641 = vmatpush1.bf16.msra.mxu0 %v302
    %642 = vmatprep.subr.bf16.mxu0 0
    %643 = vmatpush1.bf16.msra.mxu0 %v311
    %644 = vmatprep.subr.bf16.mxu0 0
    %645 = vmatpush1.bf16.msra.mxu0 0
    %646 = vmatprep.subr.bf16.mxu0 0
    %647 = vmatpush1.bf16.msra.mxu0 0
    %648 = vmatprep.subr.bf16.mxu0 0
    %649 = vmatpush1.bf16.msra.mxu0 0
    %650 = vmatprep.subr.bf16.mxu0 0
    %651 = vmatpush1.bf16.msra.mxu0 0
    %652 = vmatprep.subr.bf16.mxu0 0
    %653 = vmatpush1.bf16.msra.mxu0 0
    %654 = vmatprep.subr.bf16.mxu0 0
    %655 = vmatpush1.bf16.msra.mxu0 0
    %656 = vmatprep.subr.bf16.mxu0 0
    %657 = vmatpush1.bf16.msra.mxu0 0
    %658 = vmatprep.subr.bf16.mxu0 0
    %659 = vmatpush1.bf16.msra.mxu0 0
    %660 = vmatprep.subr.bf16.mxu0 0
    %661 = vmatpush1.bf16.msra.mxu0 0
    %662 = vmatprep.subr.bf16.mxu0 0
    %663 = vmatpush1.bf16.msra.mxu0 0
    %664 = vmatprep.subr.bf16.mxu0 0
    %665 = vmatpush1.bf16.msra.mxu0 0
    %666 = vmatprep.subr.bf16.mxu0 0
    %667 = vmatpush1.bf16.msra.mxu0 0
    %668 = vmatprep.mubr.bf16.mxu0 0
    %669 = vmatmul.mubr.bf16.gmra.mrb[0].mxu0 %v634
    %v670 = vpop.f32.mrb[0].mxu0
    %v671 = vadd.f32 0.0, %v670
    %v672 = vpop.f32.mrb[0].mxu0
    %v673 = vpop.f32.mrb[0].mxu0
    %v674 = vadd.f32 0.0, %v673
    %v675 = vpop.f32.mrb[0].mxu0
    %676 = vdwg.mxu0
    %s677 = scalar_lea.vmem [#allocation2], 96
    %v678 = vld [vmem:[%s677] sm:$0xff]
    %v679 = vld [vmem:[%s677 + $0x8] sm:$0xff]
    %v680 = vadd.f32 %v678, %v671
    %v681 = vadd.f32 %v679, %v674
    %v682 = vtanh.pop %v680
    %v683 = vtanh.pop %v681
    %v684 = vadd.f32 %v630, %v682
    %v685 = vadd.f32 %v631, %v683
    %v686 = vpack.c.bf16 %v683, %v682
    %v688 = vsel %vm144, %v686, 0
    %690 = vmatprep.subr.bf16.mxu0 0
    %691 = vmatpush1.bf16.msra.mxu0 %v300
    %692 = vmatprep.subr.bf16.mxu0 0
    %693 = vmatpush1.bf16.msra.mxu0 %v301
    %694 = vmatprep.subr.bf16.mxu0 0
    %695 = vmatpush1.bf16.msra.mxu0 %v302
    %696 = vmatprep.subr.bf16.mxu0 0
    %697 = vmatpush1.bf16.msra.mxu0 %v311
    %698 = vmatprep.subr.bf16.mxu0 0
    %699 = vmatpush1.bf16.msra.mxu0 0
    %700 = vmatprep.subr.bf16.mxu0 0
    %701 = vmatpush1.bf16.msra.mxu0 0
    %702 = vmatprep.subr.bf16.mxu0 0
    %703 = vmatpush1.bf16.msra.mxu0 0
    %704 = vmatprep.subr.bf16.mxu0 0
    %705 = vmatpush1.bf16.msra.mxu0 0
    %706 = vmatprep.subr.bf16.mxu0 0
    %707 = vmatpush1.bf16.msra.mxu0 0
    %708 = vmatprep.subr.bf16.mxu0 0
    %709 = vmatpush1.bf16.msra.mxu0 0
    %710 = vmatprep.subr.bf16.mxu0 0
    %711 = vmatpush1.bf16.msra.mxu0 0
    %712 = vmatprep.subr.bf16.mxu0 0
    %713 = vmatpush1.bf16.msra.mxu0 0
    %714 = vmatprep.subr.bf16.mxu0 0
    %715 = vmatpush1.bf16.msra.mxu0 0
    %716 = vmatprep.subr.bf16.mxu0 0
    %717 = vmatpush1.bf16.msra.mxu0 0
    %718 = vmatprep.subr.bf16.mxu0 0
    %719 = vmatpush1.bf16.msra.mxu0 0
    %720 = vmatprep.subr.bf16.mxu0 0
    %721 = vmatpush1.bf16.msra.mxu0 0
    %722 = vmatprep.mubr.bf16.mxu0 0
    %723 = vmatmul.mubr.bf16.gmra.mrb[0].mxu0 %v688
    %v724 = vpop.f32.mrb[0].mxu0
    %v725 = vadd.f32 0.0, %v724
    %v726 = vpop.f32.mrb[0].mxu0
    %v727 = vpop.f32.mrb[0].mxu0
    %v728 = vadd.f32 0.0, %v727
    %v729 = vpop.f32.mrb[0].mxu0
    %730 = vdwg.mxu0
    %s731 = scalar_lea.vmem [#allocation2], 112
    %v732 = vld [vmem:[%s731] sm:$0xff]
    %v733 = vld [vmem:[%s731 + $0x8] sm:$0xff]
    %v734 = vadd.f32 %v732, %v725
    %v735 = vadd.f32 %v733, %v728
    %v736 = vtanh.pop %v734
    %v737 = vtanh.pop %v735
    %v738 = vadd.f32 %v684, %v736
    %v739 = vadd.f32 %v685, %v737
    %v741 = vsel %vm144, %v738, 0
    %v744 = vsel %vm144, %v739, 0
    %vm746 = vcmask 1041408
    %v748 = vsel %vm746, %v58, 0
    %750 = vmatprep.subr.mxu0 0.0
    %751 = vmatpush1.msra.mxu0 %v52
    %752 = vmatprep.subr.mxu0 0.0
    %753 = vmatpush1.msra.mxu0 %v53
    %754 = vmatprep.subr.mxu0 0.0
    %755 = vmatpush1.msra.mxu0 %v54
    %756 = vmatprep.subr.mxu0 0.0
    %757 = vmatpush1.msra.mxu0 %v55
    %758 = vmatprep.subr.mxu0 0.0
    %759 = vmatpush1.msra.mxu0 %v56
    %760 = vmatprep.subr.mxu0 0.0
    %761 = vmatpush1.msra.mxu0 %v57
    %762 = vmatprep.subr.mxu0 0.0
    %763 = vmatpush1.msra.mxu0 %v748
    %764 = vmatprep.subr.mxu0 0.0
    %765 = vmatpush1.msra.mxu0 0.0
    %766 = vmatprep.subr.mxu0 0.0
    %767 = vmatpush1.msra.mxu0 0.0
    %768 = vmatprep.subr.mxu0 0.0
    %769 = vmatpush1.msra.mxu0 0.0
    %770 = vmatprep.subr.mxu0 0.0
    %771 = vmatpush1.msra.mxu0 0.0
    %772 = vmatprep.subr.mxu0 0.0
    %773 = vmatpush1.msra.mxu0 0.0
    %774 = vmatprep.subr.mxu0 0.0
    %775 = vmatpush1.msra.mxu0 0.0
    %776 = vmatprep.subr.mxu0 0.0
    %777 = vmatpush1.msra.mxu0 0.0
    %778 = vmatprep.subr.mxu0 0.0
    %779 = vmatpush1.msra.mxu0 0.0
    %780 = vmatprep.subr.mxu0 0.0
    %781 = vmatpush1.msra.mxu0 0.0
    %782 = vmatprep.subr.mxu0 0.0
    %783 = vmatpush1.msra.mxu0 0.0
    %784 = vmatprep.subr.mxu0 0.0
    %785 = vmatpush1.msra.mxu0 0.0
    %786 = vmatprep.subr.mxu0 0.0
    %787 = vmatpush1.msra.mxu0 0.0
    %788 = vmatprep.subr.mxu0 0.0
    %789 = vmatpush1.msra.mxu0 0.0
    %790 = vmatprep.subr.mxu0 0.0
    %791 = vmatpush1.msra.mxu0 0.0
    %792 = vmatprep.subr.mxu0 0.0
    %793 = vmatpush1.msra.mxu0 0.0
    %794 = vmatprep.subr.mxu0 0.0
    %795 = vmatpush1.msra.mxu0 0.0
    %796 = vmatprep.subr.mxu0 0.0
    %797 = vmatpush1.msra.mxu0 0.0
    %798 = vmatprep.subr.mxu0 0.0
    %799 = vmatpush1.msra.mxu0 0.0
    %800 = vmatprep.subr.mxu0 0.0
    %801 = vmatpush1.msra.mxu0 0.0
    %802 = vmatprep.subr.mxu0 0.0
    %803 = vmatpush1.msra.mxu0 0.0
    %804 = vmatprep.subr.mxu0 0.0
    %805 = vmatpush1.msra.mxu0 0.0
    %806 = vmatprep.subr.mxu0 0.0
    %807 = vmatpush1.msra.mxu0 0.0
    %808 = vmatprep.subr.mxu0 0.0
    %809 = vmatpush1.msra.mxu0 0.0
    %810 = vmatprep.subr.mxu0 0.0
    %811 = vmatpush1.msra.mxu0 0.0
    %812 = vmatprep.subr.mxu0 0.0
    %813 = vmatpush1.msra.mxu0 0.0
    %814 = vmatprep.mubr.f32.mxu0 0.0
    %815 = vmatmul.mubr.f32.gmra.mrb[0].mxu0 %v741
    %v816 = vpop.f32.mrb[0].mxu0
    %v817 = vadd.f32 0.0, %v816
    %v818 = vpop.f32.mrb[0].mxu0
    %819 = vmatprep.mubr.f32.mxu0 0.0
    %820 = vmatmul.mubr.f32.gmra.mrb[0].mxu0 %v744
    %v821 = vpop.f32.mrb[0].mxu0
    %v822 = vadd.f32 0.0, %v821
    %v823 = vpop.f32.mrb[0].mxu0
    %824 = vdwg.mxu0
    %v825 = vmul.f32 %v817, 0.125
    %v826 = vmul.f32 %v822, 0.125
    %v828 = vlaneseq
    %v829 = vshrl.u32 %v828, 7
    %v830 = vsub.s32 0, %v829
    %v831 = vrot.slane %v59, %v830
    %v833 = vadd.f32 %v825, %v831
    %v834 = vadd.f32 %v826, %v831
    %v835 = vxor.u32 %v833, 2147483648
    %v836 = vxor.u32 %v834, 2147483648
    %v837 = vmul.f32 %v835, 1.442695
    %v838 = vpow.pop %v837
    %v839 = vmul.f32 %v836, 1.442695
    %v840 = vpow.pop %v839
    %v841 = vadd.f32 %v838, 1.0
    %v842 = vadd.f32 %v840, 1.0
    %v843 = vrcp.pop %v841
    %v844 = vmul.f32 1.0, %v843
    %v845 = vrcp.pop %v842
    %v846 = vmul.f32 1.0, %v845
    %vm847 = vcmask 15360
    %848 = vst.msk [vmem:[%s6] sm:$0xff] %vm847, %v844
    %849 = vst.msk [vmem:[%s6 + $0x8] sm:$0xff] %vm847, %v846
    // Predicated region
    $region30: #{tpu_custom_call.1} parent=1 // pred_check
      _
    $region31: #{tpu_custom_call.1} parent=1 // pred_check_branch
      %851 = sbr.rel (0) target = $region33
    $region32: #{tpu_custom_call.1} parent=1 // pred_region
      _
    $region33: #{tpu_custom_call.1} parent=1 // pred_fallthru
      _
    // Predicated region
    $region34: #{tpu_custom_call.1} parent=1 // pred_check
      _
    $region35: #{tpu_custom_call.1} parent=1 // pred_check_branch
      %853 = sbr.rel (0) target = $region37
    $region36: #{tpu_custom_call.1} parent=1 // pred_region
      _
    $region37: #{tpu_custom_call.1} parent=1 // pred_fallthru
      _
    %854 = vsyncpa [#allocation4], 1

</llo_original>
